<compile_context>
chip_gen: v6e
topology: v6e:2x2x1
jax: 0.10.0
libtpu: 0.0.40
codegen_flags: <defaults>
</compile_context>

<pallas_src>
import math

import jax
import jax.numpy as jnp
from jax.experimental import pallas as pl
from jax.experimental.pallas import tpu as pltpu

KERNEL_SIZE = 3
PAD = 1  # padding = 1 for kernel_size = 3 (matches the PyTorch module)

# Interior offset of the feature maps inside the padded VMEM scratch planes.
# Multiples of the native (8, 128) vreg tile, so interior loads/stores are
# aligned; the surrounding zero frame supplies the conv's zero padding.
ROW_OFF = 8
COL_OFF = 128


def _spatial_attention_kernel(w_ref, x_ref, o_ref, sum_ref, max_ref):
    # w_ref  : (18,) f32 SMEM  [9 avg taps pre-scaled by 1/C, 9 max taps], (kh, kw) row-major
    # x_ref  : (C_TILE, H, W)  VMEM input block (one image, one channel tile)
    # o_ref  : (H, W)          VMEM output block (sigmoid attention map)
    # sum_ref, max_ref : (H + 2*ROW_OFF, W + 2*COL_OFF) f32 VMEM scratch planes.
    #   Channel-sum / channel-max accumulate in the aligned interior window;
    #   the zero frame around it is the 3x3 conv's zero halo (no HBM pad pass).
    c_idx = pl.program_id(1)
    n_c = pl.num_programs(1)
    _, H, W = x_ref.shape

    r0, r1 = ROW_OFF, ROW_OFF + H
    c0, c1 = COL_OFF, COL_OFF + W

    # Block-wide channel reduction of this channel tile (f32 accumulation).
    x = x_ref[...].astype(jnp.float32)          # (C_TILE, H, W)
    part_sum = jnp.sum(x, axis=0)               # (H, W)
    part_max = jnp.max(x, axis=0)               # (H, W)

    @pl.when(c_idx == 0)
    def _():
        # Zero the whole plane (establishes the zero halo), then write the
        # first partials into the aligned interior.
        sum_ref[...] = jnp.zeros_like(sum_ref)
        max_ref[...] = jnp.zeros_like(max_ref)
        sum_ref[r0:r1, c0:c1] = part_sum
        max_ref[r0:r1, c0:c1] = part_max

    @pl.when(c_idx > 0)
    def _():
        sum_ref[r0:r1, c0:c1] = sum_ref[r0:r1, c0:c1] + part_sum
        max_ref[r0:r1, c0:c1] = jnp.maximum(max_ref[r0:r1, c0:c1], part_max)

    @pl.when(c_idx == n_c - 1)
    def _():
        # Load the padded planes once and slice out the (H+2, W+2) zero-padded
        # neighbourhoods of the avg / max maps (1/C is folded into the taps).
        sum_full = sum_ref[...]
        max_full = max_ref[...]
        avg_p = sum_full[r0 - PAD:r1 + PAD, c0 - PAD:c1 + PAD]   # (H+2, W+2)
        max_p = max_full[r0 - PAD:r1 + PAD, c0 - PAD:c1 + PAD]   # (H+2, W+2)

        # 3x3 conv over the 2-channel (avg, max) stack via 18 shifted-window MACs.
        acc = jnp.zeros((H, W), jnp.float32)
        for ci, feat in enumerate((avg_p, max_p)):
            for kh in range(KERNEL_SIZE):
                for kw in range(KERNEL_SIZE):
                    w = w_ref[ci * KERNEL_SIZE * KERNEL_SIZE + kh * KERNEL_SIZE + kw]
                    acc = acc + w * feat[kh:kh + H, kw:kw + W]

        o_ref[...] = jax.nn.sigmoid(acc).astype(o_ref.dtype)


def spatial_attention(x, conv_weight, *, max_c_tile_bytes=4 * 1024 * 1024):
    """SpatialAttention forward.

    x           : (B, C, H, W)
    conv_weight : (1, 2, 3, 3) — nn.Conv2d(2, 1, 3, padding=1, bias=False).weight
    returns     : (B, 1, H, W) sigmoid attention map (same dtype as x).
    """
    B, C, H, W = x.shape
    itemsize = jnp.dtype(x.dtype).itemsize

    # Channel tile: largest divisor of C whose (c_tile, H, W) input block fits the
    # per-buffer VMEM budget (the pipeline double-buffers this block).
    max_ct = max(1, max_c_tile_bytes // max(1, H * W * itemsize))
    c_tile = 1
    for d in range(1, C + 1):
        if C % d == 0 and d <= max_ct:
            c_tile = d
    n_c = C // c_tile

    # Flatten conv weight to 18 SMEM scalars; fold the 1/C mean normalization
    # into the avg-channel taps (drops a full VPU multiply pass in the kernel).
    w = conv_weight.astype(jnp.float32).reshape(2, KERNEL_SIZE * KERNEL_SIZE)
    w = w * jnp.array([[1.0 / C], [1.0]], dtype=jnp.float32)
    w_flat = w.reshape(-1)                       # (18,)

    pad_shape = (H + 2 * ROW_OFF, W + 2 * COL_OFF)

    out = pl.pallas_call(
        _spatial_attention_kernel,
        out_shape=jax.ShapeDtypeStruct((B, H, W), x.dtype),
        grid_spec=pltpu.PrefetchScalarGridSpec(
            num_scalar_prefetch=0,
            grid=(B, n_c),                       # B parallel, C = trailing reduction axis
            in_specs=[
                pl.BlockSpec(memory_space=pltpu.MemorySpace.SMEM),           # 18 conv taps
                pl.BlockSpec((None, c_tile, H, W), lambda b, c: (b, c, 0, 0)),  # x tile
            ],
            out_specs=pl.BlockSpec((None, H, W), lambda b, c: (b, 0, 0)),
            scratch_shapes=[
                pltpu.VMEM(pad_shape, jnp.float32),   # channel-sum accumulator + zero halo
                pltpu.VMEM(pad_shape, jnp.float32),   # channel-max accumulator + zero halo
            ],
        ),
        compiler_params=pltpu.CompilerParams(
            dimension_semantics=("parallel", "arbitrary"),
            vmem_limit_bytes=32 * 1024 * 1024,
        ),
    )(w_flat, x)

    return out[:, None, :, :]                    # (B, 1, H, W), keepdim semantics


def _reference(x, conv_weight):
    avg = jnp.mean(x, axis=1, keepdims=True)
    mx = jnp.max(x, axis=1, keepdims=True)
    cat = jnp.concatenate([avg, mx], axis=1)
    y = jax.lax.conv_general_dilated(
        cat, conv_weight, window_strides=(1, 1),
        padding=((PAD, PAD), (PAD, PAD)),
        dimension_numbers=("NCHW", "OIHW", "NCHW"))
    return jax.nn.sigmoid(y)


if __name__ == "__main__":
    key = jax.random.PRNGKey(0)
    kx, kw = jax.random.split(key)

    B, C, H, W = 2, 4, 16, 16
    x = jax.random.normal(kx, (B, C, H, W), dtype=jnp.float32)

    # Deterministic Conv2d(2, 1, 3, bias=False)-like weight.
    fan_in = 2 * KERNEL_SIZE * KERNEL_SIZE
    bound = 1.0 / math.sqrt(fan_in)
    conv_weight = jax.random.uniform(
        kw, (1, 2, KERNEL_SIZE, KERNEL_SIZE), dtype=jnp.float32,
        minval=-bound, maxval=bound)

    out = spatial_attention(x, conv_weight)
    out = jax.block_until_ready(out)

    ref = _reference(x, conv_weight)
    assert out.shape == (B, 1, H, W), out.shape
    assert jnp.allclose(out, ref, atol=1e-5, rtol=1e-5), "mismatch vs reference"

    print("KERNEL_OK")
</pallas_src>

<mosaic_0001>
module attributes {stable_mosaic.version = 11 : i64} {
  func.func @_spatial_attention_kernel(%arg0: i32, %arg1: i32, %arg2: memref<18xf32, #tpu.memory_space<smem>>, %arg3: memref<1x4x16x16xf32, #tpu.memory_space<vmem>>, %arg4: memref<1x16x16xf32, #tpu.memory_space<vmem>>, %arg5: memref<32x272xf32, #tpu.memory_space<vmem>>, %arg6: memref<32x272xf32, #tpu.memory_space<vmem>>) attributes {dimension_semantics = [#tpu.dimension_semantics<parallel>, #tpu.dimension_semantics<arbitrary>], iteration_bounds = array<i64: 2, 1>, scalar_prefetch = 0 : i64, scratch_operands = 2 : i64, tpu.core_type = #tpu.core_type<tc>, window_params = [{transform_indices = @transform_0, window_bounds = array<i64: 18>}, {transform_indices = @transform_1, window_bounds = array<i64: 1, 4, 16, 16>}, {transform_indices = @transform_2, window_bounds = array<i64: 1, 16, 16>}]} {
    %c0 = arith.constant 0 : index
    %c0_0 = arith.constant 0 : index
    %c0_1 = arith.constant 0 : index
    %c0_2 = arith.constant 0 : index
    %0 = vector.load %arg3[%c0, %c0_0, %c0_1, %c0_2] : memref<1x4x16x16xf32, #tpu.memory_space<vmem>>, vector<1x4x16x16xf32>
    %1 = vector.shape_cast %0 : vector<1x4x16x16xf32> to vector<4x16x16xf32>
    %cst = arith.constant dense<0.000000e+00> : vector<16x16xf32>
    %2 = vector.multi_reduction <add>, %1, %cst [0] : vector<4x16x16xf32> to vector<16x16xf32>
    %cst_3 = arith.constant dense<0xFF800000> : vector<16x16xf32>
    %3 = vector.multi_reduction <maximumf>, %1, %cst_3 [0] : vector<4x16x16xf32> to vector<16x16xf32>
    %c0_i32 = arith.constant 0 : i32
    %4 = arith.cmpi eq, %arg1, %c0_i32 : i32
    %5 = arith.extui %4 : i1 to i32
    %c0_i32_4 = arith.constant 0 : i32
    %6 = arith.cmpi ne, %5, %c0_i32_4 : i32
    scf.if %6 {
      %cst_9 = arith.constant 0.000000e+00 : f32
      %13 = vector.broadcast %cst_9 : f32 to vector<32x272xf32>
      %c0_10 = arith.constant 0 : index
      %c0_11 = arith.constant 0 : index
      %14 = vector.load %arg5[%c0_10, %c0_11] : memref<32x272xf32, #tpu.memory_space<vmem>>, vector<32x272xf32>
      tpu.vector_store %arg5[%c0_10, %c0_11], %13 {strides = array<i32>} : memref<32x272xf32, #tpu.memory_space<vmem>>, vector<32x272xf32>,
      %cst_12 = arith.constant 0.000000e+00 : f32
      %15 = vector.broadcast %cst_12 : f32 to vector<32x272xf32>
      %c0_13 = arith.constant 0 : index
      %c0_14 = arith.constant 0 : index
      %16 = vector.load %arg6[%c0_13, %c0_14] : memref<32x272xf32, #tpu.memory_space<vmem>>, vector<32x272xf32>
      tpu.vector_store %arg6[%c0_13, %c0_14], %15 {strides = array<i32>} : memref<32x272xf32, #tpu.memory_space<vmem>>, vector<32x272xf32>,
      %c8 = arith.constant 8 : index
      %c128 = arith.constant 128 : index
      %17 = vector.load %arg5[%c8, %c128] : memref<32x272xf32, #tpu.memory_space<vmem>>, vector<16x16xf32>
      tpu.vector_store %arg5[%c8, %c128], %2 {strides = array<i32>} : memref<32x272xf32, #tpu.memory_space<vmem>>, vector<16x16xf32>,
      %c8_15 = arith.constant 8 : index
      %c128_16 = arith.constant 128 : index
      %18 = vector.load %arg6[%c8_15, %c128_16] : memref<32x272xf32, #tpu.memory_space<vmem>>, vector<16x16xf32>
      tpu.vector_store %arg6[%c8_15, %c128_16], %3 {strides = array<i32>} : memref<32x272xf32, #tpu.memory_space<vmem>>, vector<16x16xf32>,
    } else {
    }
    %c0_i32_5 = arith.constant 0 : i32
    %7 = arith.cmpi sgt, %arg1, %c0_i32_5 : i32
    %8 = arith.extui %7 : i1 to i32
    %c0_i32_6 = arith.constant 0 : i32
    %9 = arith.cmpi ne, %8, %c0_i32_6 : i32
    scf.if %9 {
      %c8 = arith.constant 8 : index
      %c128 = arith.constant 128 : index
      %13 = vector.load %arg5[%c8, %c128] : memref<32x272xf32, #tpu.memory_space<vmem>>, vector<16x16xf32>
      %14 = arith.addf %13, %2 : vector<16x16xf32>
      %c8_9 = arith.constant 8 : index
      %c128_10 = arith.constant 128 : index
      %15 = vector.load %arg5[%c8_9, %c128_10] : memref<32x272xf32, #tpu.memory_space<vmem>>, vector<16x16xf32>
      tpu.vector_store %arg5[%c8_9, %c128_10], %14 {strides = array<i32>} : memref<32x272xf32, #tpu.memory_space<vmem>>, vector<16x16xf32>,
      %c8_11 = arith.constant 8 : index
      %c128_12 = arith.constant 128 : index
      %16 = vector.load %arg6[%c8_11, %c128_12] : memref<32x272xf32, #tpu.memory_space<vmem>>, vector<16x16xf32>
      %17 = arith.maximumf %16, %3 : vector<16x16xf32>
      %c8_13 = arith.constant 8 : index
      %c128_14 = arith.constant 128 : index
      %18 = vector.load %arg6[%c8_13, %c128_14] : memref<32x272xf32, #tpu.memory_space<vmem>>, vector<16x16xf32>
      tpu.vector_store %arg6[%c8_13, %c128_14], %17 {strides = array<i32>} : memref<32x272xf32, #tpu.memory_space<vmem>>, vector<16x16xf32>,
    } else {
    }
    %c0_i32_7 = arith.constant 0 : i32
    %10 = arith.cmpi eq, %arg1, %c0_i32_7 : i32
    %11 = arith.extui %10 : i1 to i32
    %c0_i32_8 = arith.constant 0 : i32
    %12 = arith.cmpi ne, %11, %c0_i32_8 : i32
    scf.if %12 {
      %c0_9 = arith.constant 0 : index
      %c0_10 = arith.constant 0 : index
      %13 = vector.load %arg5[%c0_9, %c0_10] : memref<32x272xf32, #tpu.memory_space<vmem>>, vector<32x272xf32>
      %c0_11 = arith.constant 0 : index
      %c0_12 = arith.constant 0 : index
      %14 = vector.load %arg6[%c0_11, %c0_12] : memref<32x272xf32, #tpu.memory_space<vmem>>, vector<32x272xf32>
      %15 = vector.extract_strided_slice %13 {offsets = [7, 127], sizes = [18, 18], strides = [1, 1]} : vector<32x272xf32> to vector<18x18xf32>
      %16 = vector.extract_strided_slice %14 {offsets = [7, 127], sizes = [18, 18], strides = [1, 1]} : vector<32x272xf32> to vector<18x18xf32>
      %cst_13 = arith.constant 0.000000e+00 : f32
      %17 = vector.broadcast %cst_13 : f32 to vector<16x16xf32>
      %c0_14 = arith.constant 0 : index
      %18 = memref.load %arg2[%c0_14] : memref<18xf32, #tpu.memory_space<smem>>
      %19 = vector.extract_strided_slice %15 {offsets = [0, 0], sizes = [16, 16], strides = [1, 1]} : vector<18x18xf32> to vector<16x16xf32>
      %20 = vector.broadcast %18 : f32 to vector<16x16xf32>
      %21 = arith.mulf %20, %19 : vector<16x16xf32>
      %22 = arith.addf %17, %21 : vector<16x16xf32>
      %c1 = arith.constant 1 : index
      %23 = memref.load %arg2[%c1] : memref<18xf32, #tpu.memory_space<smem>>
      %24 = vector.extract_strided_slice %15 {offsets = [0, 1], sizes = [16, 16], strides = [1, 1]} : vector<18x18xf32> to vector<16x16xf32>
      %25 = vector.broadcast %23 : f32 to vector<16x16xf32>
      %26 = arith.mulf %25, %24 : vector<16x16xf32>
      %27 = arith.addf %22, %26 : vector<16x16xf32>
      %c2 = arith.constant 2 : index
      %28 = memref.load %arg2[%c2] : memref<18xf32, #tpu.memory_space<smem>>
      %29 = vector.extract_strided_slice %15 {offsets = [0, 2], sizes = [16, 16], strides = [1, 1]} : vector<18x18xf32> to vector<16x16xf32>
      %30 = vector.broadcast %28 : f32 to vector<16x16xf32>
      %31 = arith.mulf %30, %29 : vector<16x16xf32>
      %32 = arith.addf %27, %31 : vector<16x16xf32>
      %c3 = arith.constant 3 : index
      %33 = memref.load %arg2[%c3] : memref<18xf32, #tpu.memory_space<smem>>
      %34 = vector.extract_strided_slice %15 {offsets = [1, 0], sizes = [16, 16], strides = [1, 1]} : vector<18x18xf32> to vector<16x16xf32>
      %35 = vector.broadcast %33 : f32 to vector<16x16xf32>
      %36 = arith.mulf %35, %34 : vector<16x16xf32>
      %37 = arith.addf %32, %36 : vector<16x16xf32>
      %c4 = arith.constant 4 : index
      %38 = memref.load %arg2[%c4] : memref<18xf32, #tpu.memory_space<smem>>
      %39 = vector.extract_strided_slice %15 {offsets = [1, 1], sizes = [16, 16], strides = [1, 1]} : vector<18x18xf32> to vector<16x16xf32>
      %40 = vector.broadcast %38 : f32 to vector<16x16xf32>
      %41 = arith.mulf %40, %39 : vector<16x16xf32>
      %42 = arith.addf %37, %41 : vector<16x16xf32>
      %c5 = arith.constant 5 : index
      %43 = memref.load %arg2[%c5] : memref<18xf32, #tpu.memory_space<smem>>
      %44 = vector.extract_strided_slice %15 {offsets = [1, 2], sizes = [16, 16], strides = [1, 1]} : vector<18x18xf32> to vector<16x16xf32>
      %45 = vector.broadcast %43 : f32 to vector<16x16xf32>
      %46 = arith.mulf %45, %44 : vector<16x16xf32>
      %47 = arith.addf %42, %46 : vector<16x16xf32>
      %c6 = arith.constant 6 : index
      %48 = memref.load %arg2[%c6] : memref<18xf32, #tpu.memory_space<smem>>
      %49 = vector.extract_strided_slice %15 {offsets = [2, 0], sizes = [16, 16], strides = [1, 1]} : vector<18x18xf32> to vector<16x16xf32>
      %50 = vector.broadcast %48 : f32 to vector<16x16xf32>
      %51 = arith.mulf %50, %49 : vector<16x16xf32>
      %52 = arith.addf %47, %51 : vector<16x16xf32>
      %c7 = arith.constant 7 : index
      %53 = memref.load %arg2[%c7] : memref<18xf32, #tpu.memory_space<smem>>
      %54 = vector.extract_strided_slice %15 {offsets = [2, 1], sizes = [16, 16], strides = [1, 1]} : vector<18x18xf32> to vector<16x16xf32>
      %55 = vector.broadcast %53 : f32 to vector<16x16xf32>
      %56 = arith.mulf %55, %54 : vector<16x16xf32>
      %57 = arith.addf %52, %56 : vector<16x16xf32>
      %c8 = arith.constant 8 : index
      %58 = memref.load %arg2[%c8] : memref<18xf32, #tpu.memory_space<smem>>
      %59 = vector.extract_strided_slice %15 {offsets = [2, 2], sizes = [16, 16], strides = [1, 1]} : vector<18x18xf32> to vector<16x16xf32>
      %60 = vector.broadcast %58 : f32 to vector<16x16xf32>
      %61 = arith.mulf %60, %59 : vector<16x16xf32>
      %62 = arith.addf %57, %61 : vector<16x16xf32>
      %c9 = arith.constant 9 : index
      %63 = memref.load %arg2[%c9] : memref<18xf32, #tpu.memory_space<smem>>
      %64 = vector.extract_strided_slice %16 {offsets = [0, 0], sizes = [16, 16], strides = [1, 1]} : vector<18x18xf32> to vector<16x16xf32>
      %65 = vector.broadcast %63 : f32 to vector<16x16xf32>
      %66 = arith.mulf %65, %64 : vector<16x16xf32>
      %67 = arith.addf %62, %66 : vector<16x16xf32>
      %c10 = arith.constant 10 : index
      %68 = memref.load %arg2[%c10] : memref<18xf32, #tpu.memory_space<smem>>
      %69 = vector.extract_strided_slice %16 {offsets = [0, 1], sizes = [16, 16], strides = [1, 1]} : vector<18x18xf32> to vector<16x16xf32>
      %70 = vector.broadcast %68 : f32 to vector<16x16xf32>
      %71 = arith.mulf %70, %69 : vector<16x16xf32>
      %72 = arith.addf %67, %71 : vector<16x16xf32>
      %c11 = arith.constant 11 : index
      %73 = memref.load %arg2[%c11] : memref<18xf32, #tpu.memory_space<smem>>
      %74 = vector.extract_strided_slice %16 {offsets = [0, 2], sizes = [16, 16], strides = [1, 1]} : vector<18x18xf32> to vector<16x16xf32>
      %75 = vector.broadcast %73 : f32 to vector<16x16xf32>
      %76 = arith.mulf %75, %74 : vector<16x16xf32>
      %77 = arith.addf %72, %76 : vector<16x16xf32>
      %c12 = arith.constant 12 : index
      %78 = memref.load %arg2[%c12] : memref<18xf32, #tpu.memory_space<smem>>
      %79 = vector.extract_strided_slice %16 {offsets = [1, 0], sizes = [16, 16], strides = [1, 1]} : vector<18x18xf32> to vector<16x16xf32>
      %80 = vector.broadcast %78 : f32 to vector<16x16xf32>
      %81 = arith.mulf %80, %79 : vector<16x16xf32>
      %82 = arith.addf %77, %81 : vector<16x16xf32>
      %c13 = arith.constant 13 : index
      %83 = memref.load %arg2[%c13] : memref<18xf32, #tpu.memory_space<smem>>
      %84 = vector.extract_strided_slice %16 {offsets = [1, 1], sizes = [16, 16], strides = [1, 1]} : vector<18x18xf32> to vector<16x16xf32>
      %85 = vector.broadcast %83 : f32 to vector<16x16xf32>
      %86 = arith.mulf %85, %84 : vector<16x16xf32>
      %87 = arith.addf %82, %86 : vector<16x16xf32>
      %c14 = arith.constant 14 : index
      %88 = memref.load %arg2[%c14] : memref<18xf32, #tpu.memory_space<smem>>
      %89 = vector.extract_strided_slice %16 {offsets = [1, 2], sizes = [16, 16], strides = [1, 1]} : vector<18x18xf32> to vector<16x16xf32>
      %90 = vector.broadcast %88 : f32 to vector<16x16xf32>
      %91 = arith.mulf %90, %89 : vector<16x16xf32>
      %92 = arith.addf %87, %91 : vector<16x16xf32>
      %c15 = arith.constant 15 : index
      %93 = memref.load %arg2[%c15] : memref<18xf32, #tpu.memory_space<smem>>
      %94 = vector.extract_strided_slice %16 {offsets = [2, 0], sizes = [16, 16], strides = [1, 1]} : vector<18x18xf32> to vector<16x16xf32>
      %95 = vector.broadcast %93 : f32 to vector<16x16xf32>
      %96 = arith.mulf %95, %94 : vector<16x16xf32>
      %97 = arith.addf %92, %96 : vector<16x16xf32>
      %c16 = arith.constant 16 : index
      %98 = memref.load %arg2[%c16] : memref<18xf32, #tpu.memory_space<smem>>
      %99 = vector.extract_strided_slice %16 {offsets = [2, 1], sizes = [16, 16], strides = [1, 1]} : vector<18x18xf32> to vector<16x16xf32>
      %100 = vector.broadcast %98 : f32 to vector<16x16xf32>
      %101 = arith.mulf %100, %99 : vector<16x16xf32>
      %102 = arith.addf %97, %101 : vector<16x16xf32>
      %c17 = arith.constant 17 : index
      %103 = memref.load %arg2[%c17] : memref<18xf32, #tpu.memory_space<smem>>
      %104 = vector.extract_strided_slice %16 {offsets = [2, 2], sizes = [16, 16], strides = [1, 1]} : vector<18x18xf32> to vector<16x16xf32>
      %105 = vector.broadcast %103 : f32 to vector<16x16xf32>
      %106 = arith.mulf %105, %104 : vector<16x16xf32>
      %107 = arith.addf %102, %106 : vector<16x16xf32>
      %108 = arith.negf %107 : vector<16x16xf32>
      %109 = math.exp %108 : vector<16x16xf32>
      %cst_15 = arith.constant 1.000000e+00 : f32
      %110 = vector.broadcast %cst_15 : f32 to vector<16x16xf32>
      %111 = arith.addf %110, %109 : vector<16x16xf32>
      %112 = arith.divf %110, %111 : vector<16x16xf32>
      %c0_16 = arith.constant 0 : index
      %c0_17 = arith.constant 0 : index
      %c0_18 = arith.constant 0 : index
      %113 = vector.load %arg4[%c0_16, %c0_17, %c0_18] : memref<1x16x16xf32, #tpu.memory_space<vmem>>, vector<1x16x16xf32>
      %114 = vector.shape_cast %113 : vector<1x16x16xf32> to vector<16x16xf32>
      %115 = vector.shape_cast %112 : vector<16x16xf32> to vector<1x16x16xf32>
      tpu.vector_store %arg4[%c0_16, %c0_17, %c0_18], %115 {strides = array<i32>} : memref<1x16x16xf32, #tpu.memory_space<vmem>>, vector<1x16x16xf32>,
    } else {
    }
    return
  }
  func.func @transform_0(%arg0: i32, %arg1: i32) -> i32 {
    %c0_i32 = arith.constant 0 : i32
    %c0_i32_0 = arith.constant 0 : i32
    return %c0_i32 : i32
  }
  func.func @transform_1(%arg0: i32, %arg1: i32) -> (i32, i32, i32, i32) {
    %c0_i32 = arith.constant 0 : i32
    %c0_i32_0 = arith.constant 0 : i32
    %c0_i32_1 = arith.constant 0 : i32
    return %arg0, %arg1, %c0_i32, %c0_i32_0 : i32, i32, i32, i32
  }
  func.func @transform_2(%arg0: i32, %arg1: i32) -> (i32, i32, i32) {
    %c0_i32 = arith.constant 0 : i32
    %c0_i32_0 = arith.constant 0 : i32
    %c0_i32_1 = arith.constant 0 : i32
    return %arg0, %c0_i32, %c0_i32_0 : i32, i32, i32
  }
}

</mosaic_0001>

<llo_original>
// kernel: tpu_custom_call.1
$region0: #{tpu_custom_call.1}
  #allocation0 [shape = 'u32[]', space=smem, size = 0x4, offset = 0x4, fixed_abs, tag = 'smem constant byte address 0x4 - core index']
  #allocation1 [shape = 'u32[144,128]{1,0:T(1,128)}', space=vmem, size = 0x12000, scoped, tag = 'internal scratch']
  #allocation2 [shape = 'f32[32,272]{1,0:T(8,128)}', space=vmem, size = 0xc000, scoped, tag = 'scratch operand']
  #allocation3 [shape = 'f32[32,272]{1,0:T(8,128)}', space=vmem, size = 0xc000, scoped, tag = 'scratch operand']
  %s0 = inlined_call_operand.hbm [shape: f32[18], index: 0, kind: input, shape index: {}]
  %s1 = inlined_call_operand.hbm [shape: f32[2,4,16,16], index: 1, kind: input, shape index: {}]
  %s2 = inlined_call_operand.hbm [shape: f32[2,16,16], index: 2, kind: output, shape index: {}]
  %s3 = sld [smem:[#allocation0]]
  $region61: #{tpu_custom_call.1} parent=0
    _
  %s5 = ssub.s32 1, %s3
  %s6 = scalar_select 0, %s5, %s3
  $region1: #{tpu_custom_call.1} parent=0
    #allocation4 [shape = 'u8[512]{0}', space=smem, size = 0x200, scoped, tag = 'input window, operand 0, single buffered']
    #allocation5 [shape = 's32[2]{0}', space=sflag, size = 0x8, scoped, tag = 'scoped memory for tpu_custom_call.1']
    #allocation6 [shape = 's32[2]{0}', space=sflag, size = 0x8, scoped, tag = 'scoped memory for tpu_custom_call.1']
    #allocation7 [shape = 's32[2]{0}', space=sflag, size = 0x8, scoped, tag = 'scoped memory for tpu_custom_call.1']
    #allocation8 [shape = 'u8[65536]{0}', space=vmem, size = 0x10000, scoped, tag = 'input window, operand 1']
    #allocation9 [shape = 'u8[16384]{0}', space=vmem, size = 0x4000, scoped, tag = 'output window, operand 0']
    %7 = vsyncpa [#allocation7], 0
    %8 = vsyncpa [#allocation5], 0
    %s9 = scalar_lea.sflag [#allocation5], 1
    %10 = vsyncpa %s9, 0
    %11 = vsyncpa [#allocation6], 0
    %s12 = scalar_lea.sflag [#allocation6], 1
    %13 = vsyncpa %s12, 0
    loop: start=0, step=1, limit=4
    $region2: #{tpu_custom_call.1} parent=1 // loop_pre_header
      _
    $region3: #{tpu_custom_call.1} parent=1 // loop_header
      %s15 = sphi 0, %s19
      %p16 = scmp.ge.s32.totalorder %s15, 4
      %s22 = sphi 0, %s34
      %s23 = sphi 0, %s30
      %s24 = sphi 0, %s22
      %s25 = sphi 0, %s23
      %s26 = sphi 0, %s24
      %s27 = sphi 0, %s25
      %s35 = sphi 0, %s35
      %s37 = sphi 0, %s35
      %s38 = sphi 0, %s37
      %s52 = sphi 0, %s38
      %s60 = sphi 0, %s62
      %s63 = sphi 0, %s60
      %s64 = sphi 0, %s63
      %s80 = sphi 0, %s64
      %s86 = sphi 0, %s88
      %s89 = sphi 0, %s86
      %s90 = sphi 0, %s89
      %s106 = sphi 0, %s90
    $region4: #{tpu_custom_call.1} parent=1 // loop_header_branch
      %18 = sbr.rel (%p16) target = $region8
    $region5: #{tpu_custom_call.1} parent=1 // loop_body
      %s20 = ssub.s32 %s15, 1
      %s21 = ssub.s32 %s15, 2
      %s28 = sadd.s32 1, %s23
      %p29 = scmp.ge.s32.totalorder %s28, 1
      %s30 = scalar_select %p29, 0, %s28
      %s31 = sadd.s32 1, %s22
      %s32 = scalar_select %p29, %s31, %s22
      %p33 = scmp.ge.s32.totalorder %s32, 2
      %s34 = scalar_select %p33, 0, %s32
      %s36 = sadd.s32 %s35, 1
      %p39 = scmp.eq.s32.totalorder %s15, 1
      %p40 = scmp.ne.s32.totalorder %s35, %s37
      %p41 = scmp.eq.s32.totalorder %s15, 0
      %p42 = por %p40, %p41
      %p43 = scmp.ne.s32.totalorder %s35, %s37
      %p44 = scmp.eq.s32.totalorder %s20, 1
      %p45 = por %p43, %p44
      %p46 = scmp.ne.s32.totalorder %s37, %s38
      %p47 = scmp.eq.s32.totalorder %s20, 0
      %p48 = por %p46, %p47
      %p49 = scmp.ne.s32.totalorder %s37, %s38
      %p50 = scmp.eq.s32.totalorder %s21, 1
      %p51 = por %p49, %p50
      %p53 = scmp.ne.s32.totalorder %s38, %s52
      %p54 = scmp.eq.s32.totalorder %s21, 0
      %p55 = por %p53, %p54
      %s56 = ssub.s32 %s22, %s34
      %s57 = ssub.s32 %s23, %s30
      %s58 = sor.u32 %s56, %s57
      %p59 = scmp.eq.s32.totalorder %s58, 0
      %s61 = sadd.s32 %s60, 1
      %s62 = scalar_select %p59, %s60, %s61
      %p65 = pneg %p59
      %p66 = scmp.eq.s32.totalorder %s15, 1
      %p67 = por %p65, %p66
      %p68 = scmp.ne.s32.totalorder %s60, %s63
      %p69 = scmp.eq.s32.totalorder %s15, 0
      %p70 = por %p68, %p69
      %p71 = scmp.ne.s32.totalorder %s60, %s63
      %p72 = scmp.eq.s32.totalorder %s20, 1
      %p73 = por %p71, %p72
      %p74 = scmp.ne.s32.totalorder %s63, %s64
      %p75 = scmp.eq.s32.totalorder %s20, 0
      %p76 = por %p74, %p75
      %p77 = scmp.ne.s32.totalorder %s63, %s64
      %p78 = scmp.eq.s32.totalorder %s21, 1
      %p79 = por %p77, %p78
      %p81 = scmp.ne.s32.totalorder %s64, %s80
      %p82 = scmp.eq.s32.totalorder %s21, 0
      %p83 = por %p81, %p82
      %s84 = ssub.s32 %s22, %s34
      %p85 = scmp.eq.s32.totalorder %s84, 0
      %s87 = sadd.s32 %s86, 1
      %s88 = scalar_select %p85, %s86, %s87
      %p91 = pneg %p85
      %p92 = scmp.eq.s32.totalorder %s15, 1
      %p93 = por %p91, %p92
      %p94 = scmp.ne.s32.totalorder %s86, %s89
      %p95 = scmp.eq.s32.totalorder %s15, 0
      %p96 = por %p94, %p95
      %p97 = scmp.ne.s32.totalorder %s86, %s89
      %p98 = scmp.eq.s32.totalorder %s20, 1
      %p99 = por %p97, %p98
      %p100 = scmp.ne.s32.totalorder %s89, %s90
      %p101 = scmp.eq.s32.totalorder %s20, 0
      %p102 = por %p100, %p101
      %p103 = scmp.ne.s32.totalorder %s89, %s90
      %p104 = scmp.eq.s32.totalorder %s21, 1
      %p105 = por %p103, %p104
      %p107 = scmp.ne.s32.totalorder %s90, %s106
      %p108 = scmp.eq.s32.totalorder %s21, 0
      %p109 = por %p107, %p108
      %p110 = scmp.le.s32.totalorder 1, %s15
      %p111 = scmp.lt.s32.totalorder %s15, 3
      %p112 = pnand %p110, %p111
      %p113 = pneg %p112
      // Predicated region
      $region9: #{tpu_custom_call.1} parent=5 // pred_check
        _
      $region10: #{tpu_custom_call.1} parent=5 // pred_check_branch
        %115 = sbr.rel (%p112) target = $region12
      $region11: #{tpu_custom_call.1} parent=5 // pred_region
        %s116 = ssub.s32 %s15, 1
        // Predicated region
        $region13: #{tpu_custom_call.1} parent=11 // pred_check
          %p117 = pneg %p48
        $region14: #{tpu_custom_call.1} parent=11 // pred_check_branch
          %119 = sbr.rel (%p117) target = $region16
        $region15: #{tpu_custom_call.1} parent=11 // pred_region
          %s121 = ssub.s32 16, 16
          %122 = vsyncadd [#allocation7], %s121
          %125 = dma.hbm_to_smem %s0, 16, [#allocation4], [#allocation7]
        $region16: #{tpu_custom_call.1} parent=11 // pred_fallthru
          _
      $region12: #{tpu_custom_call.1} parent=5 // pred_fallthru
        _
      %p126 = scmp.lt.s32.totalorder %s15, 2
      // Predicated region
      $region17: #{tpu_custom_call.1} parent=5 // pred_check
        %p127 = pneg %p126
      $region18: #{tpu_custom_call.1} parent=5 // pred_check_branch
        %129 = sbr.rel (%p127) target = $region20
      $region19: #{tpu_custom_call.1} parent=5 // pred_region
        // Predicated region
        $region21: #{tpu_custom_call.1} parent=19 // pred_check
          %p130 = pneg %p70
        $region22: #{tpu_custom_call.1} parent=19 // pred_check_branch
          %132 = sbr.rel (%p130) target = $region24
        $region23: #{tpu_custom_call.1} parent=19 // pred_region
          %s133 = sand.u32 %s60, 1
          %s134 = scalar_lea.sflag [#allocation5], %s133
          %s135 = sand.u32 %s60, 1
          %s136 = smul.addr %s135, 64
          %s137 = scalar_lea.vmem [#allocation8], %s136
          %s138 = smul.u32 4, %s23
          %s140 = ssub.s32 1024, 1024
          %141 = vsyncadd %s134, %s140
          %s142 = smul.addr %s138, 2
          %s143 = smul.addr %s22, 8
          %s144 = sadd.s32 %s142, %s143
          %s145 = smul.addr %s144, 128
          %s146 = scalar_lea.hbm %s1, %s145
          %s147 = sshll.u32 %s137, 4
          %s148 = int_to_ptr.vmem [resolvable:$true] %s147
          %153 = dma.hbm_to_vmem [thread:$0]  %s146, 1024, %s148, %s134, 128, 128, 8
        $region24: #{tpu_custom_call.1} parent=19 // pred_fallthru
          _
      $region20: #{tpu_custom_call.1} parent=5 // pred_fallthru
        _
      %p154 = scmp.le.s32.totalorder 1, %s15
      %p155 = scmp.lt.s32.totalorder %s15, 3
      %p156 = pnand %p154, %p155
      %p157 = pneg %p156
      // Predicated region
      $region25: #{tpu_custom_call.1} parent=5 // pred_check
        _
      $region26: #{tpu_custom_call.1} parent=5 // pred_check_branch
        %159 = sbr.rel (%p156) target = $region28
      $region27: #{tpu_custom_call.1} parent=5 // pred_region
        %s160 = ssub.s32 %s15, 1
        // Predicated region
        $region29: #{tpu_custom_call.1} parent=27 // pred_check
          %p161 = pneg %p48
        $region30: #{tpu_custom_call.1} parent=27 // pred_check_branch
          %163 = sbr.rel (%p161) target = $region32
        $region31: #{tpu_custom_call.1} parent=27 // pred_region
          %164 = dma.done [#allocation7], 16
        $region32: #{tpu_custom_call.1} parent=27 // pred_fallthru
          _
        %s165 = sand.u32 %s63, 1
        %s166 = scalar_lea.sflag [#allocation5], %s165
        %s167 = sand.u32 %s63, 1
        %s168 = smul.addr %s167, 64
        %s169 = scalar_lea.vmem [#allocation8], %s168
        // Predicated region
        $region33: #{tpu_custom_call.1} parent=27 // pred_check
          %p170 = pneg %p76
        $region34: #{tpu_custom_call.1} parent=27 // pred_check_branch
          %172 = sbr.rel (%p170) target = $region36
        $region35: #{tpu_custom_call.1} parent=27 // pred_region
          %173 = dma.done %s166, 1024
        $region36: #{tpu_custom_call.1} parent=27 // pred_fallthru
          _
        %174 = sfence
        %p175 = pneg %p48
        %p176 = pneg %p45
        %s177 = sand.u32 %s63, 1
        %s178 = scalar_lea.sflag [#allocation5], %s177
        %s179 = sand.u32 %s63, 1
        %s180 = smul.addr %s179, 64
        %s181 = scalar_lea.vmem [#allocation8], %s180
        %p182 = pneg %p76
        %p183 = pneg %p73
        %p184 = pneg %p102
        %p185 = pneg %p99
        %s186 = sand.u32 %s89, 1
        %s187 = scalar_lea.sflag [#allocation6], %s186
        %s188 = sand.u32 %s89, 1
        %s189 = smul.addr %s188, 16
        %s190 = scalar_lea.vmem [#allocation9], %s189
        %s191 = smul.u32 4, %s25
        %v192 = vld [vmem:[%s169] sm:$0xff]
        %v193 = vld [vmem:[%s169 + $0x8] sm:$0xff]
        %v194 = vld [vmem:[%s169 + $0x10] sm:$0xff]
        %v195 = vld [vmem:[%s169 + $0x18] sm:$0xff]
        %v196 = vld [vmem:[%s169 + $0x20] sm:$0xff]
        %v197 = vld [vmem:[%s169 + $0x28] sm:$0xff]
        %v198 = vld [vmem:[%s169 + $0x30] sm:$0xff]
        %v199 = vld [vmem:[%s169 + $0x38] sm:$0xff]
        %vm200 = vcmask 130048
        %v201 = vsel %vm200, %v192, 0.0
        %v202 = vsel %vm200, %v194, 0.0
        %v203 = vadd.f32 %v201, %v202
        %v204 = vsel %vm200, %v196, 0.0
        %v205 = vadd.f32 %v203, %v204
        %v206 = vsel %vm200, %v198, 0.0
        %v207 = vadd.f32 %v205, %v206
        %v208 = vsel %vm200, %v193, 0.0
        %v209 = vsel %vm200, %v195, 0.0
        %v210 = vadd.f32 %v208, %v209
        %v211 = vsel %vm200, %v197, 0.0
        %v212 = vadd.f32 %v210, %v211
        %v213 = vsel %vm200, %v199, 0.0
        %v214 = vadd.f32 %v212, %v213
        %v215 = vsel %vm200, %v192, -inf
        %v216 = vsel %vm200, %v194, -inf
        %v217 = vsel %vm200, %v196, -inf
        %v218 = vmax.f32 %v215, %v217
        %v219 = vsel %vm200, %v198, -inf
        %v220 = vmax.f32 %v216, %v219
        %v221 = vmax.f32 %v218, %v220
        %v222 = vsel %vm200, %v193, -inf
        %v223 = vsel %vm200, %v195, -inf
        %v224 = vsel %vm200, %v197, -inf
        %v225 = vmax.f32 %v222, %v224
        %v226 = vsel %vm200, %v199, -inf
        %v227 = vmax.f32 %v223, %v226
        %v228 = vmax.f32 %v225, %v227
        %p229 = scmp.eq.s32.totalorder %s25, 0
        // Predicated region
        $region37: #{tpu_custom_call.1} parent=27 // pred_check
          %p230 = pneg %p229
        $region38: #{tpu_custom_call.1} parent=27 // pred_check_branch
          %232 = sbr.rel (%p230) target = $region40
        $region39: #{tpu_custom_call.1} parent=27 // pred_region
          %233 = vst [vmem:[#allocation2] sm:$0xff] 0.0
          %234 = vst [vmem:[#allocation2 + $0x8] sm:$0xff] 0.0
          %235 = vst.msk [vmem:[#allocation2 + $0x10] sm:$0xff] %vm200, 0.0
          %236 = vst [vmem:[#allocation2 + $0x18] sm:$0xff] 0.0
          %237 = vst [vmem:[#allocation2 + $0x20] sm:$0xff] 0.0
          %238 = vst.msk [vmem:[#allocation2 + $0x28] sm:$0xff] %vm200, 0.0
          %239 = vst [vmem:[#allocation2 + $0x30] sm:$0xff] 0.0
          %240 = vst [vmem:[#allocation2 + $0x38] sm:$0xff] 0.0
          %241 = vst.msk [vmem:[#allocation2 + $0x40] sm:$0xff] %vm200, 0.0
          %242 = vst [vmem:[#allocation2 + $0x48] sm:$0xff] 0.0
          %243 = vst [vmem:[#allocation2 + $0x50] sm:$0xff] 0.0
          %244 = vst.msk [vmem:[#allocation2 + $0x58] sm:$0xff] %vm200, 0.0
          %245 = vst [vmem:[#allocation3] sm:$0xff] 0.0
          %246 = vst [vmem:[#allocation3 + $0x8] sm:$0xff] 0.0
          %247 = vst.msk [vmem:[#allocation3 + $0x10] sm:$0xff] %vm200, 0.0
          %248 = vst [vmem:[#allocation3 + $0x18] sm:$0xff] 0.0
          %249 = vst [vmem:[#allocation3 + $0x20] sm:$0xff] 0.0
          %250 = vst.msk [vmem:[#allocation3 + $0x28] sm:$0xff] %vm200, 0.0
          %251 = vst [vmem:[#allocation3 + $0x30] sm:$0xff] 0.0
          %252 = vst [vmem:[#allocation3 + $0x38] sm:$0xff] 0.0
          %253 = vst.msk [vmem:[#allocation3 + $0x40] sm:$0xff] %vm200, 0.0
          %254 = vst [vmem:[#allocation3 + $0x48] sm:$0xff] 0.0
          %255 = vst [vmem:[#allocation3 + $0x50] sm:$0xff] 0.0
          %256 = vst.msk [vmem:[#allocation3 + $0x58] sm:$0xff] %vm200, 0.0
          %257 = vst.msk [vmem:[#allocation2 + $0x20] sm:$0xff] %vm200, %v207
          %258 = vst.msk [vmem:[#allocation2 + $0x38] sm:$0xff] %vm200, %v214
          %259 = vst.msk [vmem:[#allocation3 + $0x20] sm:$0xff] %vm200, %v221
          %260 = vst.msk [vmem:[#allocation3 + $0x38] sm:$0xff] %vm200, %v228
        $region40: #{tpu_custom_call.1} parent=27 // pred_fallthru
          _
        %p261 = scmp.gt.s32.totalorder %s25, 0
        // Predicated region
        $region41: #{tpu_custom_call.1} parent=27 // pred_check
          %p262 = pneg %p261
        $region42: #{tpu_custom_call.1} parent=27 // pred_check_branch
          %264 = sbr.rel (%p262) target = $region44
        $region43: #{tpu_custom_call.1} parent=27 // pred_region
          %v265 = vld [vmem:[#allocation2 + $0x20] sm:$0xff]
          %v266 = vld [vmem:[#allocation2 + $0x38] sm:$0xff]
          %v267 = vadd.f32 %v265, %v207
          %v268 = vadd.f32 %v266, %v214
          %269 = vst.msk [vmem:[#allocation2 + $0x20] sm:$0xff] %vm200, %v267
          %270 = vst.msk [vmem:[#allocation2 + $0x38] sm:$0xff] %vm200, %v268
          %v271 = vld [vmem:[#allocation3 + $0x20] sm:$0xff]
          %v272 = vld [vmem:[#allocation3 + $0x38] sm:$0xff]
          %v273 = vmax.f32 %v271, %v221
          %v274 = vmax.f32 %v272, %v228
          %275 = vst.msk [vmem:[#allocation3 + $0x20] sm:$0xff] %vm200, %v273
          %276 = vst.msk [vmem:[#allocation3 + $0x38] sm:$0xff] %vm200, %v274
        $region44: #{tpu_custom_call.1} parent=27 // pred_fallthru
          _
        // Predicated region
        $region45: #{tpu_custom_call.1} parent=27 // pred_check
          %p277 = pneg %p229
        $region46: #{tpu_custom_call.1} parent=27 // pred_check_branch
          %279 = sbr.rel (%p277) target = $region48
        $region47: #{tpu_custom_call.1} parent=27 // pred_region
          %v280 = vld [vmem:[#allocation2] sm:$0xff]
          %v281 = vld [vmem:[#allocation2 + $0x8] sm:$0xff]
          %v282 = vld [vmem:[#allocation2 + $0x18] sm:$0xff]
          %v283 = vld [vmem:[#allocation2 + $0x20] sm:$0xff]
          %v284 = vld [vmem:[#allocation2 + $0x30] sm:$0xff]
          %v285 = vld [vmem:[#allocation2 + $0x38] sm:$0xff]
          %v286 = vld [vmem:[#allocation2 + $0x48] sm:$0xff]
          %v287 = vld [vmem:[#allocation2 + $0x50] sm:$0xff]
          %v288 = vld [vmem:[#allocation3] sm:$0xff]
          %v289 = vld [vmem:[#allocation3 + $0x8] sm:$0xff]
          %v290 = vld [vmem:[#allocation3 + $0x18] sm:$0xff]
          %v291 = vld [vmem:[#allocation3 + $0x20] sm:$0xff]
          %v292 = vld [vmem:[#allocation3 + $0x30] sm:$0xff]
          %v293 = vld [vmem:[#allocation3 + $0x38] sm:$0xff]
          %v294 = vld [vmem:[#allocation3 + $0x48] sm:$0xff]
          %v295 = vld [vmem:[#allocation3 + $0x50] sm:$0xff]
          %s296 = sld [smem:[#allocation4]]
          %v297 = vstv %s296
          %v298 = vmul.f32 %v297, %v280
          %v299 = vmul.f32 %v297, %v281
          %v300 = vmul.f32 %v297, %v282
          %v301 = vmul.f32 %v297, %v283
          %v302 = vmul.f32 %v297, %v284
          %v303 = vmul.f32 %v297, %v285
          %v304 = vadd.f32 %v298, 0.0
          %v305 = vadd.f32 %v299, 0.0
          %v306 = vadd.f32 %v300, 0.0
          %v307 = vadd.f32 %v301, 0.0
          %v308 = vadd.f32 %v302, 0.0
          %v309 = vadd.f32 %v303, 0.0
          %s310 = sld [smem:[#allocation4 + $0x1]]
          %v311 = vstv %s310
          %v312 = vmul.f32 %v311, %v281
          %v313 = vmul.f32 %v311, %v283
          %v314 = vmul.f32 %v311, %v285
          %318 = vrot.lane.b32.xlu0 %v312, 127
          %v319 = vpop.permute.xlu0 %318
          %320 = vrot.lane.b32.xlu0 %v313, 127
          %v321 = vpop.permute.xlu0 %320
          %322 = vrot.lane.b32.xlu0 %v314, 127
          %v323 = vpop.permute.xlu0 %322
          %v327 = vadd.f32 %v304, %v319
          %v328 = vadd.f32 %v305, %v319
          %v329 = vadd.f32 %v306, %v321
          %v330 = vadd.f32 %v307, %v321
          %v331 = vadd.f32 %v308, %v323
          %v332 = vadd.f32 %v309, %v323
          %s333 = sld [smem:[#allocation4 + $0x2]]
          %v334 = vstv %s333
          %v335 = vmul.f32 %v334, %v281
          %v336 = vmul.f32 %v334, %v283
          %v337 = vmul.f32 %v334, %v285
          %341 = vrot.lane.b32.xlu0 %v335, 126
          %v342 = vpop.permute.xlu0 %341
          %343 = vrot.lane.b32.xlu0 %v336, 126
          %v344 = vpop.permute.xlu0 %343
          %345 = vrot.lane.b32.xlu0 %v337, 126
          %v346 = vpop.permute.xlu0 %345
          %v350 = vadd.f32 %v327, %v342
          %v351 = vadd.f32 %v328, %v342
          %v352 = vadd.f32 %v329, %v344
          %v353 = vadd.f32 %v330, %v344
          %v354 = vadd.f32 %v331, %v346
          %v355 = vadd.f32 %v332, %v346
          %s356 = sld [smem:[#allocation4 + $0x3]]
          %v357 = vstv %s356
          %v358 = vmul.f32 %v357, %v282
          %v359 = vmul.f32 %v357, %v283
          %v360 = vmul.f32 %v357, %v284
          %v361 = vmul.f32 %v357, %v285
          %vm366 = vcmask 1046528
          %v367 = vrot.slane %v358, 1
          %v368 = vrot.slane %v359, 1
          %v369 = vrot.slane %v360, 1
          %v370 = vsel %vm366, %v367, %v369
          %v371 = vrot.slane %v361, 1
          %v372 = vsel %vm366, %v368, %v371
          %v379 = vadd.f32 %v350, %v367
          %v380 = vadd.f32 %v351, %v368
          %v381 = vadd.f32 %v352, %v370
          %v382 = vadd.f32 %v353, %v372
          %v383 = vadd.f32 %v354, %v369
          %v384 = vadd.f32 %v355, %v371
          %s385 = sld [smem:[#allocation4 + $0x4]]
          %v386 = vstv %s385
          %v387 = vmul.f32 %v386, %v283
          %v388 = vmul.f32 %v386, %v285
          %v391 = vrot.slane %v387, 1
          %v392 = vrot.slane %v388, 1
          %v393 = vsel %vm366, %v391, %v392
          %394 = vrot.lane.b32.xlu0 %v391, 127
          %v395 = vpop.permute.xlu0 %394
          %396 = vrot.lane.b32.xlu0 %v393, 127
          %v397 = vpop.permute.xlu0 %396
          %398 = vrot.lane.b32.xlu0 %v392, 127
          %v399 = vpop.permute.xlu0 %398
          %v403 = vadd.f32 %v379, %v395
          %v404 = vadd.f32 %v380, %v395
          %v405 = vadd.f32 %v381, %v397
          %v406 = vadd.f32 %v382, %v397
          %v407 = vadd.f32 %v383, %v399
          %v408 = vadd.f32 %v384, %v399
          %s409 = sld [smem:[#allocation4 + $0x5]]
          %v410 = vstv %s409
          %v411 = vmul.f32 %v410, %v283
          %v412 = vmul.f32 %v410, %v285
          %v415 = vrot.slane %v411, 1
          %v416 = vrot.slane %v412, 1
          %v417 = vsel %vm366, %v415, %v416
          %418 = vrot.lane.b32.xlu0 %v415, 126
          %v419 = vpop.permute.xlu0 %418
          %420 = vrot.lane.b32.xlu0 %v417, 126
          %v421 = vpop.permute.xlu0 %420
          %422 = vrot.lane.b32.xlu0 %v416, 126
          %v423 = vpop.permute.xlu0 %422
          %v427 = vadd.f32 %v403, %v419
          %v428 = vadd.f32 %v404, %v419
          %v429 = vadd.f32 %v405, %v421
          %v430 = vadd.f32 %v406, %v421
          %v431 = vadd.f32 %v407, %v423
          %v432 = vadd.f32 %v408, %v423
          %s433 = sld [smem:[#allocation4 + $0x6]]
          %v434 = vstv %s433
          %v435 = vmul.f32 %v434, %v282
          %v436 = vmul.f32 %v434, %v283
          %v437 = vmul.f32 %v434, %v284
          %v438 = vmul.f32 %v434, %v285
          %v439 = vmul.f32 %v434, %v286
          %v440 = vmul.f32 %v434, %v287
          %vm447 = vcmask 1045504
          %v448 = vrot.slane %v435, 2
          %v449 = vrot.slane %v436, 2
          %v450 = vrot.slane %v437, 2
          %v451 = vsel %vm447, %v448, %v450
          %v452 = vrot.slane %v438, 2
          %v453 = vsel %vm447, %v449, %v452
          %v454 = vrot.slane %v439, 2
          %v455 = vsel %vm447, %v450, %v454
          %v456 = vrot.slane %v440, 2
          %v457 = vsel %vm447, %v452, %v456
          %v464 = vadd.f32 %v427, %v448
          %v465 = vadd.f32 %v428, %v449
          %v466 = vadd.f32 %v429, %v451
          %v467 = vadd.f32 %v430, %v453
          %v468 = vadd.f32 %v431, %v455
          %v469 = vadd.f32 %v432, %v457
          %s470 = sld [smem:[#allocation4 + $0x7]]
          %v471 = vstv %s470
          %v472 = vmul.f32 %v471, %v283
          %v473 = vmul.f32 %v471, %v285
          %v474 = vmul.f32 %v471, %v287
          %v478 = vrot.slane %v472, 2
          %v479 = vrot.slane %v473, 2
          %v480 = vsel %vm447, %v478, %v479
          %v481 = vrot.slane %v474, 2
          %v482 = vsel %vm447, %v479, %v481
          %483 = vrot.lane.b32.xlu0 %v478, 127
          %v484 = vpop.permute.xlu0 %483
          %485 = vrot.lane.b32.xlu0 %v480, 127
          %v486 = vpop.permute.xlu0 %485
          %487 = vrot.lane.b32.xlu0 %v482, 127
          %v488 = vpop.permute.xlu0 %487
          %v492 = vadd.f32 %v464, %v484
          %v493 = vadd.f32 %v465, %v484
          %v494 = vadd.f32 %v466, %v486
          %v495 = vadd.f32 %v467, %v486
          %v496 = vadd.f32 %v468, %v488
          %v497 = vadd.f32 %v469, %v488
          %s498 = sld [smem:[#allocation4 + $0x8]]
          %v499 = vstv %s498
          %v500 = vmul.f32 %v499, %v283
          %v501 = vmul.f32 %v499, %v285
          %v502 = vmul.f32 %v499, %v287
          %v506 = vrot.slane %v500, 2
          %v507 = vrot.slane %v501, 2
          %v508 = vsel %vm447, %v506, %v507
          %v509 = vrot.slane %v502, 2
          %v510 = vsel %vm447, %v507, %v509
          %511 = vrot.lane.b32.xlu0 %v506, 126
          %v512 = vpop.permute.xlu0 %511
          %513 = vrot.lane.b32.xlu0 %v508, 126
          %v514 = vpop.permute.xlu0 %513
          %515 = vrot.lane.b32.xlu0 %v510, 126
          %v516 = vpop.permute.xlu0 %515
          %v520 = vadd.f32 %v492, %v512
          %v521 = vadd.f32 %v493, %v512
          %v522 = vadd.f32 %v494, %v514
          %v523 = vadd.f32 %v495, %v514
          %v524 = vadd.f32 %v496, %v516
          %v525 = vadd.f32 %v497, %v516
          %s526 = sld [smem:[#allocation4 + $0x9]]
          %v527 = vstv %s526
          %v528 = vmul.f32 %v527, %v288
          %v529 = vmul.f32 %v527, %v289
          %v530 = vmul.f32 %v527, %v290
          %v531 = vmul.f32 %v527, %v291
          %v532 = vmul.f32 %v527, %v292
          %v533 = vmul.f32 %v527, %v293
          %v534 = vadd.f32 %v520, %v528
          %v535 = vadd.f32 %v521, %v529
          %v536 = vadd.f32 %v522, %v530
          %v537 = vadd.f32 %v523, %v531
          %v538 = vadd.f32 %v524, %v532
          %v539 = vadd.f32 %v525, %v533
          %s540 = sld [smem:[#allocation4 + $0xa]]
          %v541 = vstv %s540
          %v542 = vmul.f32 %v541, %v289
          %v543 = vmul.f32 %v541, %v291
          %v544 = vmul.f32 %v541, %v293
          %548 = vrot.lane.b32.xlu0 %v542, 127
          %v549 = vpop.permute.xlu0 %548
          %550 = vrot.lane.b32.xlu0 %v543, 127
          %v551 = vpop.permute.xlu0 %550
          %552 = vrot.lane.b32.xlu0 %v544, 127
          %v553 = vpop.permute.xlu0 %552
          %v557 = vadd.f32 %v534, %v549
          %v558 = vadd.f32 %v535, %v549
          %v559 = vadd.f32 %v536, %v551
          %v560 = vadd.f32 %v537, %v551
          %v561 = vadd.f32 %v538, %v553
          %v562 = vadd.f32 %v539, %v553
          %s563 = sld [smem:[#allocation4 + $0xb]]
          %v564 = vstv %s563
          %v565 = vmul.f32 %v564, %v289
          %v566 = vmul.f32 %v564, %v291
          %v567 = vmul.f32 %v564, %v293
          %571 = vrot.lane.b32.xlu0 %v565, 126
          %v572 = vpop.permute.xlu0 %571
          %573 = vrot.lane.b32.xlu0 %v566, 126
          %v574 = vpop.permute.xlu0 %573
          %575 = vrot.lane.b32.xlu0 %v567, 126
          %v576 = vpop.permute.xlu0 %575
          %v580 = vadd.f32 %v557, %v572
          %v581 = vadd.f32 %v558, %v572
          %v582 = vadd.f32 %v559, %v574
          %v583 = vadd.f32 %v560, %v574
          %v584 = vadd.f32 %v561, %v576
          %v585 = vadd.f32 %v562, %v576
          %s586 = sld [smem:[#allocation4 + $0xc]]
          %v587 = vstv %s586
          %v588 = vmul.f32 %v587, %v290
          %v589 = vmul.f32 %v587, %v291
          %v590 = vmul.f32 %v587, %v292
          %v591 = vmul.f32 %v587, %v293
          %v596 = vrot.slane %v588, 1
          %v597 = vrot.slane %v589, 1
          %v598 = vrot.slane %v590, 1
          %v599 = vsel %vm366, %v596, %v598
          %v600 = vrot.slane %v591, 1
          %v601 = vsel %vm366, %v597, %v600
          %v608 = vadd.f32 %v580, %v596
          %v609 = vadd.f32 %v581, %v597
          %v610 = vadd.f32 %v582, %v599
          %v611 = vadd.f32 %v583, %v601
          %v612 = vadd.f32 %v584, %v598
          %v613 = vadd.f32 %v585, %v600
          %s614 = sld [smem:[#allocation4 + $0xd]]
          %v615 = vstv %s614
          %v616 = vmul.f32 %v615, %v291
          %v617 = vmul.f32 %v615, %v293
          %v620 = vrot.slane %v616, 1
          %v621 = vrot.slane %v617, 1
          %v622 = vsel %vm366, %v620, %v621
          %623 = vrot.lane.b32.xlu0 %v620, 127
          %v624 = vpop.permute.xlu0 %623
          %625 = vrot.lane.b32.xlu0 %v622, 127
          %v626 = vpop.permute.xlu0 %625
          %627 = vrot.lane.b32.xlu0 %v621, 127
          %v628 = vpop.permute.xlu0 %627
          %v632 = vadd.f32 %v608, %v624
          %v633 = vadd.f32 %v609, %v624
          %v634 = vadd.f32 %v610, %v626
          %v635 = vadd.f32 %v611, %v626
          %v636 = vadd.f32 %v612, %v628
          %v637 = vadd.f32 %v613, %v628
          %s638 = sld [smem:[#allocation4 + $0xe]]
          %v639 = vstv %s638
          %v640 = vmul.f32 %v639, %v291
          %v641 = vmul.f32 %v639, %v293
          %v644 = vrot.slane %v640, 1
          %v645 = vrot.slane %v641, 1
          %v646 = vsel %vm366, %v644, %v645
          %647 = vrot.lane.b32.xlu0 %v644, 126
          %v648 = vpop.permute.xlu0 %647
          %649 = vrot.lane.b32.xlu0 %v646, 126
          %v650 = vpop.permute.xlu0 %649
          %651 = vrot.lane.b32.xlu0 %v645, 126
          %v652 = vpop.permute.xlu0 %651
          %v656 = vadd.f32 %v632, %v648
          %v657 = vadd.f32 %v633, %v648
          %v658 = vadd.f32 %v634, %v650
          %v659 = vadd.f32 %v635, %v650
          %v660 = vadd.f32 %v636, %v652
          %v661 = vadd.f32 %v637, %v652
          %s662 = sld [smem:[#allocation4 + $0xf]]
          %v663 = vstv %s662
          %v664 = vmul.f32 %v663, %v290
          %v665 = vmul.f32 %v663, %v291
          %v666 = vmul.f32 %v663, %v292
          %v667 = vmul.f32 %v663, %v293
          %v668 = vmul.f32 %v663, %v294
          %v669 = vmul.f32 %v663, %v295
          %v676 = vrot.slane %v664, 2
          %v677 = vrot.slane %v665, 2
          %v678 = vrot.slane %v666, 2
          %v679 = vsel %vm447, %v676, %v678
          %v680 = vrot.slane %v667, 2
          %v681 = vsel %vm447, %v677, %v680
          %v682 = vrot.slane %v668, 2
          %v683 = vsel %vm447, %v678, %v682
          %v684 = vrot.slane %v669, 2
          %v685 = vsel %vm447, %v680, %v684
          %v692 = vadd.f32 %v656, %v676
          %v693 = vadd.f32 %v657, %v677
          %v694 = vadd.f32 %v658, %v679
          %v695 = vadd.f32 %v659, %v681
          %v696 = vadd.f32 %v660, %v683
          %v697 = vadd.f32 %v661, %v685
          %s698 = sld [smem:[#allocation4 + $0x10]]
          %v699 = vstv %s698
          %v700 = vmul.f32 %v699, %v291
          %v701 = vmul.f32 %v699, %v293
          %v702 = vmul.f32 %v699, %v295
          %v706 = vrot.slane %v700, 2
          %v707 = vrot.slane %v701, 2
          %v708 = vsel %vm447, %v706, %v707
          %v709 = vrot.slane %v702, 2
          %v710 = vsel %vm447, %v707, %v709
          %711 = vrot.lane.b32.xlu0 %v706, 127
          %v712 = vpop.permute.xlu0 %711
          %713 = vrot.lane.b32.xlu0 %v708, 127
          %v714 = vpop.permute.xlu0 %713
          %715 = vrot.lane.b32.xlu0 %v710, 127
          %v716 = vpop.permute.xlu0 %715
          %v720 = vadd.f32 %v692, %v712
          %v721 = vadd.f32 %v693, %v712
          %v722 = vadd.f32 %v694, %v714
          %v723 = vadd.f32 %v695, %v714
          %v724 = vadd.f32 %v696, %v716
          %v725 = vadd.f32 %v697, %v716
          %s726 = sld [smem:[#allocation4 + $0x11]]
          %v727 = vstv %s726
          %v728 = vmul.f32 %v727, %v291
          %v729 = vmul.f32 %v727, %v293
          %v730 = vmul.f32 %v727, %v295
          %v734 = vrot.slane %v728, 2
          %v735 = vrot.slane %v729, 2
          %v736 = vsel %vm447, %v734, %v735
          %v737 = vrot.slane %v730, 2
          %v738 = vsel %vm447, %v735, %v737
          %739 = vrot.lane.b32.xlu0 %v734, 126
          %v740 = vpop.permute.xlu0 %739
          %741 = vrot.lane.b32.xlu0 %v736, 126
          %v742 = vpop.permute.xlu0 %741
          %743 = vrot.lane.b32.xlu0 %v738, 126
          %v744 = vpop.permute.xlu0 %743
          %v748 = vadd.f32 %v720, %v740
          %v749 = vadd.f32 %v721, %v740
          %v750 = vadd.f32 %v722, %v742
          %v751 = vadd.f32 %v723, %v742
          %v752 = vadd.f32 %v724, %v744
          %v753 = vadd.f32 %v725, %v744
          %v754 = vxor.u32 %v748, 2147483648
          %v755 = vxor.u32 %v749, 2147483648
          %v756 = vxor.u32 %v750, 2147483648
          %v757 = vxor.u32 %v751, 2147483648
          %v758 = vxor.u32 %v752, 2147483648
          %v759 = vxor.u32 %v753, 2147483648
          %v760 = vmul.f32 %v754, 1.442695
          %v761 = vpow.pop %v760
          %v762 = vmul.f32 %v755, 1.442695
          %v763 = vpow.pop %v762
          %v764 = vmul.f32 %v756, 1.442695
          %v765 = vpow.pop %v764
          %v766 = vmul.f32 %v757, 1.442695
          %v767 = vpow.pop %v766
          %v768 = vmul.f32 %v758, 1.442695
          %v769 = vpow.pop %v768
          %v770 = vmul.f32 %v759, 1.442695
          %v771 = vpow.pop %v770
          %v772 = vadd.f32 %v761, 1.0
          %v773 = vadd.f32 %v763, 1.0
          %v774 = vadd.f32 %v765, 1.0
          %v775 = vadd.f32 %v767, 1.0
          %v776 = vadd.f32 %v769, 1.0
          %v777 = vadd.f32 %v771, 1.0
          %v778 = vrcp.pop %v772
          %v779 = vmul.f32 1.0, %v778
          %v780 = vrcp.pop %v773
          %v781 = vmul.f32 1.0, %v780
          %v782 = vrcp.pop %v774
          %v783 = vmul.f32 1.0, %v782
          %v784 = vrcp.pop %v775
          %v785 = vmul.f32 1.0, %v784
          %v786 = vrcp.pop %v776
          %v787 = vmul.f32 1.0, %v786
          %v788 = vrcp.pop %v777
          %v789 = vmul.f32 1.0, %v788
          %796 = vrot.lane.b32.xlu0 %v779, 1
          %v797 = vpop.permute.xlu0 %796
          %798 = vrot.lane.b32.xlu0 %v781, 1
          %v799 = vpop.permute.xlu0 %798
          %800 = vrot.lane.b32.xlu0 %v783, 1
          %v801 = vpop.permute.xlu0 %800
          %802 = vrot.lane.b32.xlu0 %v785, 1
          %v803 = vpop.permute.xlu0 %802
          %804 = vrot.lane.b32.xlu0 %v787, 1
          %v805 = vpop.permute.xlu0 %804
          %806 = vrot.lane.b32.xlu0 %v789, 1
          %v807 = vpop.permute.xlu0 %806
          %vm808 = vcmask 7168
          %v809 = vsel %vm808, %v797, %v799
          %v810 = vsel %vm808, %v801, %v803
          %v811 = vsel %vm808, %v805, %v807
          %vm815 = vcmask 130055
          %816 = vst.msk [vmem:[%s190 - $0x7] sm:$0x80] %vm815, %v809
          %817 = vst.msk [vmem:[%s190 + $0x1] sm:$0xff] %vm200, %v810
          %vm818 = vcmask 129024
          %819 = vst.msk [vmem:[%s190 + $0x9] sm:$0x7f] %vm818, %v811
        $region48: #{tpu_custom_call.1} parent=27 // pred_fallthru
          _
        %s820 = sand.u32 %s89, 1
        %s821 = scalar_lea.sflag [#allocation6], %s820
        %s822 = sand.u32 %s89, 1
        %s823 = smul.addr %s822, 16
        %s824 = scalar_lea.vmem [#allocation9], %s823
        // Predicated region
        $region49: #{tpu_custom_call.1} parent=27 // pred_check
          %p825 = pneg %p99
        $region50: #{tpu_custom_call.1} parent=27 // pred_check_branch
          %827 = sbr.rel (%p825) target = $region52
        $region51: #{tpu_custom_call.1} parent=27 // pred_region
          %s829 = ssub.s32 256, 256
          %830 = vsyncadd %s821, %s829
          %s831 = smul.addr %s24, 2
          %s832 = smul.addr %s831, 128
          %s833 = scalar_lea.hbm %s2, %s832
          %s834 = sshll.u32 %s824, 4
          %s835 = int_to_ptr.vmem [resolvable:$true] %s834
          %840 = dma.vmem_to_hbm [thread:$0]  %s835, 256, %s833, %s821, 128, 128, 8
        $region52: #{tpu_custom_call.1} parent=27 // pred_fallthru
          _
      $region28: #{tpu_custom_call.1} parent=5 // pred_fallthru
        _
      %p841 = scmp.le.s32.totalorder 2, %s15
      // Predicated region
      $region53: #{tpu_custom_call.1} parent=5 // pred_check
        %p842 = pneg %p841
      $region54: #{tpu_custom_call.1} parent=5 // pred_check_branch
        %844 = sbr.rel (%p842) target = $region56
      $region55: #{tpu_custom_call.1} parent=5 // pred_region
        %s845 = ssub.s32 %s15, 2
        // Predicated region
        $region57: #{tpu_custom_call.1} parent=55 // pred_check
          %p846 = pneg %p105
        $region58: #{tpu_custom_call.1} parent=55 // pred_check_branch
          %848 = sbr.rel (%p846) target = $region60
        $region59: #{tpu_custom_call.1} parent=55 // pred_region
          %s849 = sand.u32 %s90, 1
          %s850 = scalar_lea.sflag [#allocation6], %s849
          %s851 = sand.u32 %s90, 1
          %s852 = smul.addr %s851, 16
          %s853 = scalar_lea.vmem [#allocation9], %s852
          %854 = dma.done %s850, 256
        $region60: #{tpu_custom_call.1} parent=55 // pred_fallthru
          _
      $region56: #{tpu_custom_call.1} parent=5 // pred_fallthru
        _
    $region6: #{tpu_custom_call.1} parent=1 // loop_footer
      %s19 = sadd.s32 1, %s15
    $region7: #{tpu_custom_call.1} parent=1 // loop_footer_branch
      %14 = sbr.rel target = $region3
    $region8: #{tpu_custom_call.1} parent=1 // loop_exit
      _
    %855 = vsyncpa [#allocation5], 1
    %s856 = scalar_lea.sflag [#allocation5], 1
    %857 = vsyncpa %s856, 1
    %858 = vsyncpa [#allocation6], 1
    %s859 = scalar_lea.sflag [#allocation6], 1
    %860 = vsyncpa %s859, 1
    %861 = vsyncpa [#allocation7], 1
    %s862 = scalar_lea.sflag [#allocation7], 1
    %863 = vsyncpa %s862, 1

</llo_original>
